<compile_context>
chip_gen: v6e
topology: v6e:2x2x1
jax: 0.10.0
libtpu: 0.0.40
codegen_flags: <defaults>
</compile_context>

<pallas_src>
import jax
import jax.numpy as jnp
from jax import lax
from jax.experimental import pallas as pl
from jax.experimental.pallas import tpu as pltpu


def _make_mlp_kernel(sub_block):
    """Build the fused MLP kernel with a static row sub-block size."""

    def kernel(x_ref, w1_ref, b1_ref, w2_ref, b2_ref, w3_ref, b3_ref, o_ref):
        mm_dtype = w1_ref.dtype  # bf16 (or f32) MXU operands; f32 accumulation.

        # Hoist weight / bias loads out of the row loop (blocks are
        # VMEM-resident across grid steps via constant index maps).
        w1 = w1_ref[...]
        b1 = b1_ref[...]
        w2 = w2_ref[...]
        b2 = b2_ref[...]
        w3 = w3_ref[...]
        b3 = b3_ref[...]

        tm = x_ref.shape[0]               # static block row count
        sb = min(sub_block, tm)           # static sub-block size
        n_full = tm // sb
        rem = tm - n_full * sb            # static remainder rows

        def process(n_rows, row_start):
            # In-kernel cast of x rides the VPU (plenty of slack here) and
            # avoids a separate wrapper-side HBM pass.
            xs = x_ref[pl.ds(row_start, n_rows), :].astype(mm_dtype)
            # fc1 + ReLU
            h1 = jnp.dot(xs, w1, preferred_element_type=jnp.float32)
            h1 = jnp.maximum(h1 + b1, 0.0)
            # fc2 + ReLU
            h2 = jnp.dot(h1.astype(mm_dtype), w2,
                         preferred_element_type=jnp.float32)
            h2 = jnp.maximum(h2 + b2, 0.0)
            # fc3
            logits = jnp.dot(h2.astype(mm_dtype), w3,
                             preferred_element_type=jnp.float32) + b3
            # softmax over the feature axis (PyTorch dim=1), exact f32 divide.
            m = jnp.max(logits, axis=-1, keepdims=True)
            e = jnp.exp(logits - m)
            denom = jnp.sum(e, axis=-1, keepdims=True)
            o_ref[pl.ds(row_start, n_rows), :] = (e / denom).astype(o_ref.dtype)

        if n_full == 1 and rem == 0:
            process(sb, 0)
        else:
            if n_full > 0:
                def body(s, carry):
                    process(sb, pl.multiple_of(s * sb, sb))
                    return carry
                lax.fori_loop(0, n_full, body, 0, unroll=(n_full <= 16))
            if rem > 0:
                process(rem, n_full * sb)

    return kernel


def simple_nn_forward(x, params, *, tile_m=4096, sub_block=256,
                      matmul_dtype=jnp.bfloat16):
    """x: [B, 3] float32; params: dict of (weight, bias) per layer (PyTorch layout)."""
    w1, b1 = params["fc1"]
    w2, b2 = params["fc2"]
    w3, b3 = params["fc3"]
    # PyTorch Linear stores weight as [out, in]; transpose to [in, out] for x @ W.
    # Weights go to the matmul dtype (bf16 MXU-native); biases stay f32 for the
    # VPU epilogue.  x stays f32 here and is cast inside the kernel.
    w1t = w1.T.astype(matmul_dtype)
    w2t = w2.T.astype(matmul_dtype)
    w3t = w3.T.astype(matmul_dtype)
    b1r = b1[None, :].astype(jnp.float32)
    b2r = b2[None, :].astype(jnp.float32)
    b3r = b3[None, :].astype(jnp.float32)

    B, F = x.shape
    N_OUT = w3t.shape[1]

    # Batch tile selection:
    #  * tiny batch: one full-array block (satisfies the (8,128) rule via the
    #    "equals full dim" escape).
    #  * mid-size batch: split into >=2 grid steps (multiple-of-8 rows) so
    #    v7x's 2 TensorCores can both work ("parallel" semantics).
    #  * large batch: fixed tile_m-row tiles, double-buffered by BlockSpec.
    if B <= 2 * sub_block:
        TM = B
    elif B <= tile_m:
        TM = (((B + 1) // 2) + 7) // 8 * 8
    else:
        TM = tile_m
    grid = (pl.cdiv(B, TM),)

    batch_map = lambda i: (i, 0)   # x / out tiles walk the batch
    const_map = lambda i: (0, 0)   # weights & biases stay resident in VMEM

    in_specs = [
        pl.BlockSpec((TM, F), batch_map),
        pl.BlockSpec(w1t.shape, const_map),
        pl.BlockSpec(b1r.shape, const_map),
        pl.BlockSpec(w2t.shape, const_map),
        pl.BlockSpec(b2r.shape, const_map),
        pl.BlockSpec(w3t.shape, const_map),
        pl.BlockSpec(b3r.shape, const_map),
    ]
    out_specs = pl.BlockSpec((TM, N_OUT), batch_map)

    return pl.pallas_call(
        _make_mlp_kernel(sub_block),
        out_shape=jax.ShapeDtypeStruct((B, N_OUT), jnp.float32),
        grid=grid,
        in_specs=in_specs,
        out_specs=out_specs,
        compiler_params=pltpu.CompilerParams(
            dimension_semantics=("parallel",),       # 2-TC sharding on v7x
            vmem_limit_bytes=32 * 1024 * 1024,       # fits double-buffered tiles on all gens
        ),
    )(x, w1t, b1r, w2t, b2r, w3t, b3r)


def init_params(key):
    """Deterministic init mimicking PyTorch's default Linear init (U(-1/sqrt(fan_in), +))."""
    def linear(key, fan_in, fan_out):
        kw, kb = jax.random.split(key)
        bound = 1.0 / jnp.sqrt(fan_in)
        w = jax.random.uniform(kw, (fan_out, fan_in), jnp.float32, -bound, bound)
        b = jax.random.uniform(kb, (fan_out,), jnp.float32, -bound, bound)
        return w, b

    k1, k2, k3 = jax.random.split(key, 3)
    return {
        "fc1": linear(k1, 3, 64),
        "fc2": linear(k2, 64, 64),
        "fc3": linear(k3, 64, 10),
    }


def _reference(x, params):
    w1, b1 = params["fc1"]
    w2, b2 = params["fc2"]
    w3, b3 = params["fc3"]
    h = jnp.maximum(x @ w1.T + b1, 0.0)
    h = jnp.maximum(h @ w2.T + b2, 0.0)
    logits = h @ w3.T + b3
    return jax.nn.softmax(logits, axis=1)


if __name__ == "__main__":
    key = jax.random.PRNGKey(0)
    kx, kp = jax.random.split(key)
    params = init_params(kp)

    # --- small-shape check (B=8), bf16 matmul path ---
    B = 8
    x = jax.random.normal(kx, (B, 3), jnp.float32)
    out = jax.block_until_ready(simple_nn_forward(x, params))
    ref = _reference(x, params)
    assert out.shape == (B, 10)
    assert jnp.allclose(out, ref, atol=2e-2, rtol=2e-2), "mismatch vs reference (bf16)"
    assert jnp.allclose(jnp.sum(out, axis=1), 1.0, atol=1e-5), "softmax rows must sum to 1"

    # --- f32 matmul path at the same shape (tolerance allows MXU default-precision) ---
    out_f32 = jax.block_until_ready(
        simple_nn_forward(x, params, matmul_dtype=jnp.float32))
    assert jnp.allclose(out_f32, ref, atol=1e-3, rtol=1e-3), "mismatch vs reference (f32)"
    assert jnp.allclose(jnp.sum(out_f32, axis=1), 1.0, atol=1e-5)

    # --- tiled path: 2 grid steps, partial last tile, inner sub-block remainder ---
    B2 = 1032
    x2 = jax.random.normal(kx, (B2, 3), jnp.float32)
    out2 = jax.block_until_ready(simple_nn_forward(x2, params))
    ref2 = _reference(x2, params)
    assert out2.shape == (B2, 10)
    assert jnp.allclose(out2, ref2, atol=2e-2, rtol=2e-2), "mismatch vs reference (tiled)"
    assert jnp.allclose(jnp.sum(out2, axis=1), 1.0, atol=1e-5)

    print("KERNEL_OK")
</pallas_src>

<mosaic_0001>
module attributes {stable_mosaic.version = 11 : i64} {
  func.func @kernel(%arg0: i32, %arg1: memref<8x3xf32, #tpu.memory_space<vmem>>, %arg2: memref<3x64xbf16, #tpu.memory_space<vmem>>, %arg3: memref<1x64xf32, #tpu.memory_space<vmem>>, %arg4: memref<64x64xbf16, #tpu.memory_space<vmem>>, %arg5: memref<1x64xf32, #tpu.memory_space<vmem>>, %arg6: memref<64x10xbf16, #tpu.memory_space<vmem>>, %arg7: memref<1x10xf32, #tpu.memory_space<vmem>>, %arg8: memref<8x10xf32, #tpu.memory_space<vmem>>) attributes {dimension_semantics = [#tpu.dimension_semantics<parallel>], iteration_bounds = array<i64: 1>, scalar_prefetch = 0 : i64, scratch_operands = 0 : i64, tpu.core_type = #tpu.core_type<tc>, window_params = [{transform_indices = @transform_0, window_bounds = array<i64: 8, 3>}, {pipeline_mode = #tpu.pipeline_mode<synchronous>, transform_indices = @transform_1, window_bounds = array<i64: 3, 64>}, {pipeline_mode = #tpu.pipeline_mode<synchronous>, transform_indices = @transform_2, window_bounds = array<i64: 1, 64>}, {pipeline_mode = #tpu.pipeline_mode<synchronous>, transform_indices = @transform_3, window_bounds = array<i64: 64, 64>}, {pipeline_mode = #tpu.pipeline_mode<synchronous>, transform_indices = @transform_4, window_bounds = array<i64: 1, 64>}, {pipeline_mode = #tpu.pipeline_mode<synchronous>, transform_indices = @transform_5, window_bounds = array<i64: 64, 10>}, {pipeline_mode = #tpu.pipeline_mode<synchronous>, transform_indices = @transform_6, window_bounds = array<i64: 1, 10>}, {transform_indices = @transform_7, window_bounds = array<i64: 8, 10>}]} {
    %c0 = arith.constant 0 : index
    %c0_0 = arith.constant 0 : index
    %0 = vector.load %arg2[%c0, %c0_0] : memref<3x64xbf16, #tpu.memory_space<vmem>>, vector<3x64xbf16>
    %c0_1 = arith.constant 0 : index
    %c0_2 = arith.constant 0 : index
    %1 = vector.load %arg3[%c0_1, %c0_2] : memref<1x64xf32, #tpu.memory_space<vmem>>, vector<1x64xf32>
    %c0_3 = arith.constant 0 : index
    %c0_4 = arith.constant 0 : index
    %2 = vector.load %arg4[%c0_3, %c0_4] : memref<64x64xbf16, #tpu.memory_space<vmem>>, vector<64x64xbf16>
    %c0_5 = arith.constant 0 : index
    %c0_6 = arith.constant 0 : index
    %3 = vector.load %arg5[%c0_5, %c0_6] : memref<1x64xf32, #tpu.memory_space<vmem>>, vector<1x64xf32>
    %c0_7 = arith.constant 0 : index
    %c0_8 = arith.constant 0 : index
    %4 = vector.load %arg6[%c0_7, %c0_8] : memref<64x10xbf16, #tpu.memory_space<vmem>>, vector<64x10xbf16>
    %c0_9 = arith.constant 0 : index
    %c0_10 = arith.constant 0 : index
    %5 = vector.load %arg7[%c0_9, %c0_10] : memref<1x10xf32, #tpu.memory_space<vmem>>, vector<1x10xf32>
    %c0_11 = arith.constant 0 : index
    %c0_12 = arith.constant 0 : index
    %6 = vector.load %arg1[%c0_11, %c0_12] : memref<8x3xf32, #tpu.memory_space<vmem>>, vector<8x3xf32>
    %7 = arith.truncf %6 : vector<8x3xf32> to vector<8x3xbf16>
    %cst = arith.constant dense<0.000000e+00> : vector<8x64xf32>
    %8 = tpu.matmul %7, %0, %cst {dimension_numbers = #tpu.dot_dimension_numbers<[1], [0], [0], [1], [0, 0, 1, 1], [], []>} : vector<8x3xbf16>, vector<3x64xbf16>, vector<8x64xf32> -> vector<8x64xf32>
    %9 = vector.broadcast %1 : vector<1x64xf32> to vector<8x64xf32>
    %10 = arith.addf %8, %9 : vector<8x64xf32>
    %cst_13 = arith.constant 0.000000e+00 : f32
    %11 = vector.broadcast %cst_13 : f32 to vector<8x64xf32>
    %12 = arith.maximumf %10, %11 : vector<8x64xf32>
    %13 = arith.truncf %12 : vector<8x64xf32> to vector<8x64xbf16>
    %cst_14 = arith.constant dense<0.000000e+00> : vector<8x64xf32>
    %14 = tpu.matmul %13, %2, %cst_14 {dimension_numbers = #tpu.dot_dimension_numbers<[1], [0], [0], [1], [0, 0, 1, 1], [], []>} : vector<8x64xbf16>, vector<64x64xbf16>, vector<8x64xf32> -> vector<8x64xf32>
    %15 = vector.broadcast %3 : vector<1x64xf32> to vector<8x64xf32>
    %16 = arith.addf %14, %15 : vector<8x64xf32>
    %cst_15 = arith.constant 0.000000e+00 : f32
    %17 = vector.broadcast %cst_15 : f32 to vector<8x64xf32>
    %18 = arith.maximumf %16, %17 : vector<8x64xf32>
    %19 = arith.truncf %18 : vector<8x64xf32> to vector<8x64xbf16>
    %cst_16 = arith.constant dense<0.000000e+00> : vector<8x10xf32>
    %20 = tpu.matmul %19, %4, %cst_16 {dimension_numbers = #tpu.dot_dimension_numbers<[1], [0], [0], [1], [0, 0, 1, 1], [], []>} : vector<8x64xbf16>, vector<64x10xbf16>, vector<8x10xf32> -> vector<8x10xf32>
    %21 = vector.broadcast %5 : vector<1x10xf32> to vector<8x10xf32>
    %22 = arith.addf %20, %21 : vector<8x10xf32>
    %cst_17 = arith.constant dense<0xFF800000> : vector<8xf32>
    %23 = vector.multi_reduction <maximumf>, %22, %cst_17 [1] : vector<8x10xf32> to vector<8xf32>
    %24 = vector.shape_cast %23 : vector<8xf32> to vector<8x1xf32>
    %25 = vector.broadcast %24 : vector<8x1xf32> to vector<8x10xf32>
    %26 = arith.subf %22, %25 : vector<8x10xf32>
    %27 = math.exp %26 : vector<8x10xf32>
    %cst_18 = arith.constant dense<0.000000e+00> : vector<8xf32>
    %28 = vector.multi_reduction <add>, %27, %cst_18 [1] : vector<8x10xf32> to vector<8xf32>
    %29 = vector.shape_cast %28 : vector<8xf32> to vector<8x1xf32>
    %30 = vector.broadcast %29 : vector<8x1xf32> to vector<8x10xf32>
    %31 = arith.divf %27, %30 : vector<8x10xf32>
    %c0_19 = arith.constant 0 : index
    %c0_20 = arith.constant 0 : index
    %32 = vector.load %arg8[%c0_19, %c0_20] : memref<8x10xf32, #tpu.memory_space<vmem>>, vector<8x10xf32>
    tpu.vector_store %arg8[%c0_19, %c0_20], %31 {strides = array<i32>} : memref<8x10xf32, #tpu.memory_space<vmem>>, vector<8x10xf32>,
    return
  }
  func.func @transform_0(%arg0: i32) -> (i32, i32) {
    %c0_i32 = arith.constant 0 : i32
    %c0_i32_0 = arith.constant 0 : i32
    return %arg0, %c0_i32 : i32, i32
  }
  func.func @transform_1(%arg0: i32) -> (i32, i32) {
    %c0_i32 = arith.constant 0 : i32
    %c0_i32_0 = arith.constant 0 : i32
    %c0_i32_1 = arith.constant 0 : i32
    return %c0_i32, %c0_i32_0 : i32, i32
  }
  func.func @transform_2(%arg0: i32) -> (i32, i32) {
    %c0_i32 = arith.constant 0 : i32
    %c0_i32_0 = arith.constant 0 : i32
    %c0_i32_1 = arith.constant 0 : i32
    return %c0_i32, %c0_i32_0 : i32, i32
  }
  func.func @transform_3(%arg0: i32) -> (i32, i32) {
    %c0_i32 = arith.constant 0 : i32
    %c0_i32_0 = arith.constant 0 : i32
    %c0_i32_1 = arith.constant 0 : i32
    return %c0_i32, %c0_i32_0 : i32, i32
  }
  func.func @transform_4(%arg0: i32) -> (i32, i32) {
    %c0_i32 = arith.constant 0 : i32
    %c0_i32_0 = arith.constant 0 : i32
    %c0_i32_1 = arith.constant 0 : i32
    return %c0_i32, %c0_i32_0 : i32, i32
  }
  func.func @transform_5(%arg0: i32) -> (i32, i32) {
    %c0_i32 = arith.constant 0 : i32
    %c0_i32_0 = arith.constant 0 : i32
    %c0_i32_1 = arith.constant 0 : i32
    return %c0_i32, %c0_i32_0 : i32, i32
  }
  func.func @transform_6(%arg0: i32) -> (i32, i32) {
    %c0_i32 = arith.constant 0 : i32
    %c0_i32_0 = arith.constant 0 : i32
    %c0_i32_1 = arith.constant 0 : i32
    return %c0_i32, %c0_i32_0 : i32, i32
  }
  func.func @transform_7(%arg0: i32) -> (i32, i32) {
    %c0_i32 = arith.constant 0 : i32
    %c0_i32_0 = arith.constant 0 : i32
    return %arg0, %c0_i32 : i32, i32
  }
}

</mosaic_0001>

<llo_original>
// kernel: tpu_custom_call.1
$region0: #{tpu_custom_call.1}
  #allocation0 [shape = 'u32[]', space=smem, size = 0x4, offset = 0x4, fixed_abs, tag = 'smem constant byte address 0x4 - core index']
  #allocation1 [shape = 'u32[144,128]{1,0:T(1,128)}', space=vmem, size = 0x12000, scoped, tag = 'internal scratch']
  %s0 = inlined_call_operand.vmem [shape: f32[8,3], index: 0, kind: input, shape index: {}]
  %s1 = inlined_call_operand.vmem [shape: bf16[3,64], index: 1, kind: input, shape index: {}]
  %s2 = inlined_call_operand.vmem [shape: f32[1,64], index: 2, kind: input, shape index: {}]
  %s3 = inlined_call_operand.vmem [shape: bf16[64,64], index: 3, kind: input, shape index: {}]
  %s4 = inlined_call_operand.vmem [shape: f32[1,64], index: 4, kind: input, shape index: {}]
  %s5 = inlined_call_operand.vmem [shape: bf16[64,10], index: 5, kind: input, shape index: {}]
  %s6 = inlined_call_operand.vmem [shape: f32[1,10], index: 6, kind: input, shape index: {}]
  %s7 = inlined_call_operand.hbm [shape: f32[8,10], index: 7, kind: output, shape index: {}]
  %s8 = sld [smem:[#allocation0]]
  $region38: #{tpu_custom_call.1} parent=0
    _
  %s10 = ssub.s32 1, %s8
  %s11 = scalar_select 0, %s10, %s8
  $region1: #{tpu_custom_call.1} parent=0
    #allocation2 [shape = 'u8[4096]{0}', space=vmem, size = 0x1000, scoped, tag = 'output window, operand 0, single buffered']
    #allocation3 [shape = 's32[1]{0}', space=sflag, size = 0x4, scoped, tag = 'scoped memory for tpu_custom_call.1']
    %12 = vsyncpa [#allocation3], 0
    // Predicated region
    $region2: #{tpu_custom_call.1} parent=1 // pred_check
      _
    $region3: #{tpu_custom_call.1} parent=1 // pred_check_branch
      %14 = sbr.rel (0) target = $region5
    $region4: #{tpu_custom_call.1} parent=1 // pred_region
      _
    $region5: #{tpu_custom_call.1} parent=1 // pred_fallthru
      _
    // Predicated region
    $region6: #{tpu_custom_call.1} parent=1 // pred_check
      _
    $region7: #{tpu_custom_call.1} parent=1 // pred_check_branch
      %16 = sbr.rel (0) target = $region9
    $region8: #{tpu_custom_call.1} parent=1 // pred_region
      _
    $region9: #{tpu_custom_call.1} parent=1 // pred_fallthru
      _
    // Predicated region
    $region10: #{tpu_custom_call.1} parent=1 // pred_check
      _
    $region11: #{tpu_custom_call.1} parent=1 // pred_check_branch
      %18 = sbr.rel (0) target = $region13
    $region12: #{tpu_custom_call.1} parent=1 // pred_region
      _
    $region13: #{tpu_custom_call.1} parent=1 // pred_fallthru
      _
    // Predicated region
    $region14: #{tpu_custom_call.1} parent=1 // pred_check
      _
    $region15: #{tpu_custom_call.1} parent=1 // pred_check_branch
      %20 = sbr.rel (0) target = $region17
    $region16: #{tpu_custom_call.1} parent=1 // pred_region
      _
    $region17: #{tpu_custom_call.1} parent=1 // pred_fallthru
      _
    // Predicated region
    $region18: #{tpu_custom_call.1} parent=1 // pred_check
      _
    $region19: #{tpu_custom_call.1} parent=1 // pred_check_branch
      %22 = sbr.rel (0) target = $region21
    $region20: #{tpu_custom_call.1} parent=1 // pred_region
      _
    $region21: #{tpu_custom_call.1} parent=1 // pred_fallthru
      _
    // Predicated region
    $region22: #{tpu_custom_call.1} parent=1 // pred_check
      _
    $region23: #{tpu_custom_call.1} parent=1 // pred_check_branch
      %24 = sbr.rel (0) target = $region25
    $region24: #{tpu_custom_call.1} parent=1 // pred_region
      _
    $region25: #{tpu_custom_call.1} parent=1 // pred_fallthru
      _
    // Predicated region
    $region26: #{tpu_custom_call.1} parent=1 // pred_check
      _
    $region27: #{tpu_custom_call.1} parent=1 // pred_check_branch
      %26 = sbr.rel (0) target = $region29
    $region28: #{tpu_custom_call.1} parent=1 // pred_region
      _
    $region29: #{tpu_custom_call.1} parent=1 // pred_fallthru
      _
    %v28 = vld [vmem:[%s1] sm:$0x3]
    %v29 = vld [vmem:[%s2] sm:$0x1]
    %v30 = vld [vmem:[%s3] sm:$0xf]
    %v31 = vld [vmem:[%s3 + $0x4] sm:$0xf]
    %v32 = vld [vmem:[%s3 + $0x8] sm:$0xf]
    %v33 = vld [vmem:[%s3 + $0xc] sm:$0xf]
    %v34 = vld [vmem:[%s3 + $0x10] sm:$0xf]
    %v35 = vld [vmem:[%s3 + $0x14] sm:$0xf]
    %v36 = vld [vmem:[%s3 + $0x18] sm:$0xf]
    %v37 = vld [vmem:[%s3 + $0x1c] sm:$0xf]
    %v38 = vld [vmem:[%s4] sm:$0x1]
    %v39 = vld [vmem:[%s5] sm:$0xf]
    %v40 = vld [vmem:[%s5 + $0x4] sm:$0xf]
    %v41 = vld [vmem:[%s5 + $0x8] sm:$0xf]
    %v42 = vld [vmem:[%s5 + $0xc] sm:$0xf]
    %v43 = vld [vmem:[%s5 + $0x10] sm:$0xf]
    %v44 = vld [vmem:[%s5 + $0x14] sm:$0xf]
    %v45 = vld [vmem:[%s5 + $0x18] sm:$0xf]
    %v46 = vld [vmem:[%s5 + $0x1c] sm:$0xf]
    %v47 = vld [vmem:[%s6] sm:$0x1]
    %v48 = vld [vmem:[%s0] sm:$0xff]
    %v49 = vpack.c.bf16 %v48, %v48
    %v51 = vlaneseq
    %v52 = vshrl.u32 %v51, 7
    %v53 = vsub.s32 0, %v52
    %v54 = vrot.slane %v29, %v53
    %vm56 = vcmask 23552
    %v58 = vsel %vm56, %v49, 0
    %vm60 = vcmask 1040384
    %vm61 = vcmask 1041408
    %v62 = vsel %vm60, 4294967295, 65535
    %v63 = vsel %vm61, %v62, 0
    %v65 = vand.u32 %v28, %v63
    %67 = vmatprep.subr.bf16.mxu0 0
    %68 = vmatpush1.bf16.msra.mxu0 0
    %69 = vmatprep.subr.bf16.mxu0 0
    %70 = vmatpush1.bf16.msra.mxu0 0
    %71 = vmatprep.subr.bf16.mxu0 0
    %72 = vmatpush1.bf16.msra.mxu0 0
    %73 = vmatprep.subr.bf16.mxu0 0
    %74 = vmatpush1.bf16.msra.mxu0 0
    %75 = vmatprep.subr.bf16.mxu0 0
    %76 = vmatpush1.bf16.msra.mxu0 0
    %77 = vmatprep.subr.bf16.mxu0 0
    %78 = vmatpush1.bf16.msra.mxu0 0
    %79 = vmatprep.subr.bf16.mxu0 0
    %80 = vmatpush1.bf16.msra.mxu0 0
    %81 = vmatprep.subr.bf16.mxu0 0
    %82 = vmatpush1.bf16.msra.mxu0 %v65
    %83 = vmatprep.subr.bf16.mxu0 0
    %84 = vmatpush2.bf16.msra.mxu0 0
    %85 = vmatprep.subr.bf16.mxu0 0
    %86 = vmatpush2.bf16.msra.mxu0 0
    %87 = vmatprep.subr.bf16.mxu0 0
    %88 = vmatpush2.bf16.msra.mxu0 0
    %89 = vmatprep.subr.bf16.mxu0 0
    %90 = vmatpush2.bf16.msra.mxu0 0
    %91 = vmatprep.subr.bf16.mxu0 0
    %92 = vmatpush2.bf16.msra.mxu0 0
    %93 = vmatprep.subr.bf16.mxu0 0
    %94 = vmatpush2.bf16.msra.mxu0 0
    %95 = vmatprep.subr.bf16.mxu0 0
    %96 = vmatpush2.bf16.msra.mxu0 0
    %97 = vmatprep.subr.bf16.mxu0 0
    %98 = vmatpush2.bf16.msra.mxu0 0
    %99 = vmatprep.mubr.bf16.mxu0 0
    %100 = vmatmul.mubr.bf16.gmra.mxu0 %v58
    %v101 = vpop.f32.mrf.mxu0
    %v102 = vadd.f32 %v54, %v101
    %v103 = vpop.f32.mrf.mxu0
    %v104 = vpop.f32.mrf.mxu0
    %v105 = vpop.f32.mrf.mxu0
    %106 = vdwg.mxu0
    %v107 = vmax.f32 %v102, 0.0
    %v108 = vpack.c.bf16 %v107, %v107
    %v110 = vlaneseq
    %v111 = vshrl.u32 %v110, 7
    %v112 = vsub.s32 0, %v111
    %v113 = vrot.slane %v38, %v112
    %v123 = vunpack.c.l.b16 %v30
    %v124 = vunpack.c.l.b16 %v31
    %v125 = vunpack.c.l.b16 %v32
    %v126 = vunpack.c.l.b16 %v33
    %v127 = vunpack.c.l.b16 %v34
    %v128 = vunpack.c.l.b16 %v35
    %v129 = vunpack.c.l.b16 %v36
    %v130 = vunpack.c.l.b16 %v37
    %v131 = vpack.c.b16 %v124, %v123
    %v132 = vpack.c.b16 %v126, %v125
    %v133 = vpack.c.b16 %v128, %v127
    %v134 = vpack.c.b16 %v130, %v129
    %vm139 = vcmask 523264
    %v141 = vsel %vm139, %v108, 0
    %143 = vmatprep.subr.bf16.mxu0 0
    %144 = vmatpush1.bf16.msra.mxu0 0
    %145 = vmatprep.subr.bf16.mxu0 0
    %146 = vmatpush1.bf16.msra.mxu0 0
    %147 = vmatprep.subr.bf16.mxu0 0
    %148 = vmatpush1.bf16.msra.mxu0 0
    %149 = vmatprep.subr.bf16.mxu0 0
    %150 = vmatpush1.bf16.msra.mxu0 0
    %151 = vmatprep.subr.bf16.mxu0 0
    %152 = vmatpush1.bf16.msra.mxu0 %v134
    %153 = vmatprep.subr.bf16.mxu0 0
    %154 = vmatpush1.bf16.msra.mxu0 %v133
    %155 = vmatprep.subr.bf16.mxu0 0
    %156 = vmatpush1.bf16.msra.mxu0 %v132
    %157 = vmatprep.subr.bf16.mxu0 0
    %158 = vmatpush1.bf16.msra.mxu0 %v131
    %159 = vmatprep.subr.bf16.mxu0 0
    %160 = vmatpush2.bf16.msra.mxu0 0
    %161 = vmatprep.subr.bf16.mxu0 0
    %162 = vmatpush2.bf16.msra.mxu0 0
    %163 = vmatprep.subr.bf16.mxu0 0
    %164 = vmatpush2.bf16.msra.mxu0 0
    %165 = vmatprep.subr.bf16.mxu0 0
    %166 = vmatpush2.bf16.msra.mxu0 0
    %167 = vmatprep.subr.bf16.mxu0 0
    %168 = vmatpush2.bf16.msra.mxu0 0
    %169 = vmatprep.subr.bf16.mxu0 0
    %170 = vmatpush2.bf16.msra.mxu0 0
    %171 = vmatprep.subr.bf16.mxu0 0
    %172 = vmatpush2.bf16.msra.mxu0 0
    %173 = vmatprep.subr.bf16.mxu0 0
    %174 = vmatpush2.bf16.msra.mxu0 0
    %175 = vmatprep.mubr.bf16.mxu0 0
    %176 = vmatmul.mubr.bf16.gmra.mxu0 %v141
    %v177 = vpop.f32.mrf.mxu0
    %v178 = vadd.f32 %v113, %v177
    %v179 = vpop.f32.mrf.mxu0
    %v180 = vpop.f32.mrf.mxu0
    %v181 = vpop.f32.mrf.mxu0
    %182 = vdwg.mxu0
    %v183 = vmax.f32 %v178, 0.0
    %v184 = vpack.c.bf16 %v183, %v183
    %v186 = vlaneseq
    %v187 = vshrl.u32 %v186, 7
    %v188 = vsub.s32 0, %v187
    %v189 = vrot.slane %v47, %v188
    %v199 = vunpack.c.l.b16 %v39
    %v200 = vunpack.c.l.b16 %v40
    %v201 = vunpack.c.l.b16 %v41
    %v202 = vunpack.c.l.b16 %v42
    %v203 = vunpack.c.l.b16 %v43
    %v204 = vunpack.c.l.b16 %v44
    %v205 = vunpack.c.l.b16 %v45
    %v206 = vunpack.c.l.b16 %v46
    %v207 = vpack.c.b16 %v200, %v199
    %v208 = vpack.c.b16 %v202, %v201
    %v209 = vpack.c.b16 %v204, %v203
    %v210 = vpack.c.b16 %v206, %v205
    %v216 = vsel %vm139, %v184, 0
    %218 = vmatprep.subr.bf16.mxu0 0
    %219 = vmatpush1.bf16.msra.mxu0 0
    %220 = vmatprep.subr.bf16.mxu0 0
    %221 = vmatpush1.bf16.msra.mxu0 0
    %222 = vmatprep.subr.bf16.mxu0 0
    %223 = vmatpush1.bf16.msra.mxu0 0
    %224 = vmatprep.subr.bf16.mxu0 0
    %225 = vmatpush1.bf16.msra.mxu0 0
    %226 = vmatprep.subr.bf16.mxu0 0
    %227 = vmatpush1.bf16.msra.mxu0 %v210
    %228 = vmatprep.subr.bf16.mxu0 0
    %229 = vmatpush1.bf16.msra.mxu0 %v209
    %230 = vmatprep.subr.bf16.mxu0 0
    %231 = vmatpush1.bf16.msra.mxu0 %v208
    %232 = vmatprep.subr.bf16.mxu0 0
    %233 = vmatpush1.bf16.msra.mxu0 %v207
    %234 = vmatprep.subr.bf16.mxu0 0
    %235 = vmatpush2.bf16.msra.mxu0 0
    %236 = vmatprep.subr.bf16.mxu0 0
    %237 = vmatpush2.bf16.msra.mxu0 0
    %238 = vmatprep.subr.bf16.mxu0 0
    %239 = vmatpush2.bf16.msra.mxu0 0
    %240 = vmatprep.subr.bf16.mxu0 0
    %241 = vmatpush2.bf16.msra.mxu0 0
    %242 = vmatprep.subr.bf16.mxu0 0
    %243 = vmatpush2.bf16.msra.mxu0 0
    %244 = vmatprep.subr.bf16.mxu0 0
    %245 = vmatpush2.bf16.msra.mxu0 0
    %246 = vmatprep.subr.bf16.mxu0 0
    %247 = vmatpush2.bf16.msra.mxu0 0
    %248 = vmatprep.subr.bf16.mxu0 0
    %249 = vmatpush2.bf16.msra.mxu0 0
    %250 = vmatprep.mubr.bf16.mxu0 0
    %251 = vmatmul.mubr.bf16.gmra.mxu0 %v216
    %v252 = vpop.f32.mrf.mxu0
    %v253 = vadd.f32 %v189, %v252
    %v254 = vpop.f32.mrf.mxu0
    %v255 = vpop.f32.mrf.mxu0
    %v256 = vpop.f32.mrf.mxu0
    %257 = vdwg.mxu0
    %vm258 = vcmask 80896
    %v259 = vsel %vm258, %v253, -inf
    %260 = vmax.xlane.f32.xlu0 %v259
    %v261 = vpop.xlane.xlu0 %260
    %v262 = vsub.f32 %v253, %v261
    %v263 = vmul.f32 %v262, 1.442695
    %v264 = vpow.pop %v263
    %v265 = vsel %vm258, %v264, 0.0
    %266 = vadd.xlane.f32.xlu0 %v265
    %v267 = vpop.xlane.xlu0 %266
    %v268 = vrcp.pop %v267
    %v269 = vmul.f32 %v264, %v268
    %270 = vst.msk [vmem:[#allocation2] sm:$0xff] %vm258, %v269
    // Predicated region
    $region30: #{tpu_custom_call.1} parent=1 // pred_check
      _
    $region31: #{tpu_custom_call.1} parent=1 // pred_check_branch
      %272 = sbr.rel (0) target = $region33
    $region32: #{tpu_custom_call.1} parent=1 // pred_region
      %s274 = ssub.s32 128, 128
      %275 = vsyncadd [#allocation3], %s274
      %s277 = sshll.u32 [#allocation2], 4
      %s278 = int_to_ptr.vmem [resolvable:$true] %s277
      %280 = dma.vmem_to_hbm [thread:$0]  %s278, 128, %s7, [#allocation3]
    $region33: #{tpu_custom_call.1} parent=1 // pred_fallthru
      _
    // Predicated region
    $region34: #{tpu_custom_call.1} parent=1 // pred_check
      _
    $region35: #{tpu_custom_call.1} parent=1 // pred_check_branch
      %282 = sbr.rel (0) target = $region37
    $region36: #{tpu_custom_call.1} parent=1 // pred_region
      %283 = dma.done [#allocation3], 128
    $region37: #{tpu_custom_call.1} parent=1 // pred_fallthru
      _
    %284 = vsyncpa [#allocation3], 1

</llo_original>
